<compile_context>
chip_gen: v5e
topology: v5e:2x2
jax: 0.10.0
libtpu: 0.0.40
codegen_flags: <defaults>
</compile_context>

<pallas_src>
import functools
import math

import jax
import jax.numpy as jnp
import numpy as np
from jax.experimental import pallas as pl
from jax.experimental.pallas import tpu as pltpu


def _accuracy_kernel(labels_ref, preds_ref, corr_ref, wt_ref, *,
                     threshold_logit, ignore_idx, num_classes, hw,
                     r_block, r_chunk, n_full_chunks, r_rem, n_r_inner):
    s = pl.program_id(0)       # HW super-chunk (parallel)
    r_idx = pl.program_id(2)   # reduction step within the super-chunk (arbitrary)

    @pl.when(r_idx == 0)
    def _init():
        corr_ref[...] = jnp.zeros_like(corr_ref)
        wt_ref[...] = jnp.zeros_like(wt_ref)

    # Global row offset (in units of 128-lane rows) of this grid step's block.
    base_row = (s * n_r_inner + r_idx) * r_block

    def process_chunk(row_off, size):
        # size is a static Python int; row_off may be traced.
        lbl = labels_ref[0, pl.ds(row_off, size), :]                     # (size,128) i32

        # Running max / argmax over the class axis, one (size,128) slab per class.
        # Strict '>' keeps first-occurrence tie-break (matches argmax).
        # Compute in f32 (clean single-path compares; free for f32 inputs, one
        # cheap cast per slab for bf16; avoids bf16 VPU issues on v5e).
        run_max = preds_ref[0, 0, pl.ds(row_off, size), :].astype(jnp.float32)
        run_arg = jnp.zeros((size, 128), dtype=jnp.int32)
        for c in range(1, num_classes):
            row = preds_ref[0, c, pl.ds(row_off, size), :].astype(jnp.float32)
            better = row > run_max
            run_max = jnp.where(better, row, run_max)
            run_arg = jnp.where(better, jnp.int32(c), run_arg)

        # any(sigmoid(p) > threshold, dim=C)  ==  max(p, dim=C) > logit(threshold)
        any_hit = run_max > jnp.float32(threshold_logit)
        pred_labels = jnp.where(any_hit, run_arg + 1, jnp.int32(0))      # (size,128)

        # Tail mask: only elements whose flat HW index is < hw contribute.
        rows = jax.lax.broadcasted_iota(jnp.int32, (size, 128), 0)
        lanes = jax.lax.broadcasted_iota(jnp.int32, (size, 128), 1)
        flat = (base_row + row_off + rows) * 128 + lanes
        valid = flat < hw

        corr = ((pred_labels == lbl) & valid).astype(jnp.float32)
        wt = ((lbl != ignore_idx) & valid).astype(jnp.float32)

        # Lane/sublane-parallel accumulation straight into the resident output
        # block (VPU adds; final cross-lane reduce happens in the JAX epilogue).
        corr_ref[0, 0, pl.ds(0, size), :] += corr
        wt_ref[0, 0, pl.ds(0, size), :] += wt

    if n_full_chunks == 1:
        process_chunk(0, r_chunk)
    else:
        def _chunk_body(ci, carry):
            off = pl.multiple_of(ci * r_chunk, r_chunk)
            process_chunk(off, r_chunk)
            return carry
        jax.lax.fori_loop(0, n_full_chunks, _chunk_body, None)
    if r_rem > 0:
        process_chunk(n_full_chunks * r_chunk, r_rem)


def _plan_tiles(hw, num_classes, preds_itemsize, *, r_chunk=32, r_max=512,
                input_vmem_budget=12 * 1024 * 1024):
    """Pick per-grid-step row-block / inner chunking for the (R, 128) layout."""
    r_raw = -(-hw // 128)                                   # rows of 128 lanes
    # Double-buffered preds + labels bytes per row of 128 lanes.
    per_row = 2 * 128 * (num_classes * preds_itemsize + 4)
    cap = max(1, input_vmem_budget // per_row)
    cap = min(cap, r_max)
    if r_raw <= cap:
        r_block, r_total = r_raw, r_raw                     # single block, no R pad
    else:
        cap_c = max(r_chunk, (cap // r_chunk) * r_chunk)
        best_rb, best_pad = cap_c, (-r_raw) % cap_c
        for rb in range(r_chunk, cap_c + 1, r_chunk):       # minimize tail padding
            pad = (-r_raw) % rb
            if pad < best_pad or (pad == best_pad and rb > best_rb):
                best_rb, best_pad = rb, pad
        r_block, r_total = best_rb, r_raw + best_pad
    n_r_blocks = r_total // r_block
    # >=2 parallel blocks for v7x's two TensorCores even when N == 1.
    s_split = 2 if (n_r_blocks >= 2 and n_r_blocks % 2 == 0) else 1
    n_r_inner = n_r_blocks // s_split
    r_chunk_eff = min(r_chunk, r_block)
    n_full = r_block // r_chunk_eff
    r_rem = r_block % r_chunk_eff
    return dict(r_block=r_block, r_total=r_total, s_split=s_split,
                n_r_inner=n_r_inner, r_chunk=r_chunk_eff, n_full=n_full,
                r_rem=r_rem, acc_r=r_chunk_eff)


def accuracy(labels, preds, *, dim=1, ignore_idx=-1, threshold=0.5):
    """Single forward pass of the Accuracy module (starting from zeroed buffers)."""
    assert dim == 1, "kernel assumes the class dim is axis 1 (module default)"
    N = labels.shape[0]
    Ds = labels.shape[1:]
    HW = int(np.prod(Ds)) if Ds else 1
    C = int(preds.shape[1])

    # Keep preds in their native dtype (bf16 stays bf16 -> half the HBM bytes).
    preds_r = preds.reshape(N, C, HW)
    labels_r = labels.astype(jnp.int32).reshape(N, HW)

    itemsize = jnp.dtype(preds_r.dtype).itemsize
    p = _plan_tiles(HW, C, itemsize)
    hw_pad = p["r_total"] * 128
    if hw_pad != HW:
        # Only hit when HW doesn't already fit the dense (R,128) layout.  Pad
        # values are don't-care: the kernel masks flat indices >= HW out of
        # both sums, so any constant is safe for any ignore_idx / threshold.
        preds_r = jnp.pad(preds_r, ((0, 0), (0, 0), (0, hw_pad - HW)))
        labels_r = jnp.pad(labels_r, ((0, 0), (0, hw_pad - HW)),
                           constant_values=ignore_idx)
    preds_r = preds_r.reshape(N, C, p["r_total"], 128)
    labels_r = labels_r.reshape(N, p["r_total"], 128)

    # logit(threshold): sigmoid is monotonic so sigmoid(p) > th  <=>  p > logit(th).
    if threshold <= 0.0:
        threshold_logit = float("-inf")
    elif threshold >= 1.0:
        threshold_logit = float("inf")
    else:
        threshold_logit = math.log(threshold / (1.0 - threshold))

    S, NR, RB, AR = p["s_split"], p["n_r_inner"], p["r_block"], p["acc_r"]

    kernel = functools.partial(
        _accuracy_kernel,
        threshold_logit=float(threshold_logit), ignore_idx=int(ignore_idx),
        num_classes=C, hw=HW, r_block=RB, r_chunk=p["r_chunk"],
        n_full_chunks=p["n_full"], r_rem=p["r_rem"], n_r_inner=NR)

    cost = pl.CostEstimate(
        flops=3 * C * N * HW, transcendentals=0,
        bytes_accessed=N * C * HW * itemsize + N * HW * 4)

    # TODO(synk): sweep pipeline_mode=pl.Buffered(3) on the preds BlockSpec if
    # xprof shows exposed DMA at small C.
    corr, wt = pl.pallas_call(
        kernel,
        out_shape=(jax.ShapeDtypeStruct((S, N, AR, 128), jnp.float32),
                   jax.ShapeDtypeStruct((S, N, AR, 128), jnp.float32)),
        grid_spec=pltpu.PrefetchScalarGridSpec(
            num_scalar_prefetch=0,
            grid=(S, N, NR),
            in_specs=[
                pl.BlockSpec((1, RB, 128), lambda s, n, r: (n, s * NR + r, 0)),
                pl.BlockSpec((1, C, RB, 128), lambda s, n, r: (n, 0, s * NR + r, 0)),
            ],
            out_specs=[
                pl.BlockSpec((1, 1, AR, 128), lambda s, n, r: (s, n, 0, 0)),
                pl.BlockSpec((1, 1, AR, 128), lambda s, n, r: (s, n, 0, 0)),
            ],
        ),
        compiler_params=pltpu.CompilerParams(
            dimension_semantics=("parallel", "parallel", "arbitrary"),
            vmem_limit_bytes=32 * 1024 * 1024,
        ),
        cost_estimate=cost,
    )(labels_r, preds_r)

    total = jnp.sum(corr)
    count = jnp.sum(wt)
    # per-call clamp of num_examples (module clamps before accumulating count)
    num_examples = jnp.maximum(count, jnp.float32(1.0))
    return total / num_examples


def _reference(labels, preds, *, dim=1, ignore_idx=-1, threshold=0.5):
    scores = jax.nn.sigmoid(preds.astype(jnp.float32))
    labels_pred = jnp.argmax(preds, axis=dim) + 1
    any_hit = jnp.any(scores > threshold, axis=dim)
    pred_labels = jnp.where(any_hit, labels_pred, 0)
    N = labels.shape[0]
    labels_f = labels.reshape(N, -1).astype(jnp.int32)
    pred_f = pred_labels.reshape(N, -1).astype(jnp.int32)
    weights = (labels_f != ignore_idx).astype(jnp.float32)
    num_examples = jnp.maximum(jnp.sum(weights), 1.0)
    total = jnp.sum((pred_f == labels_f).astype(jnp.float32))
    return total / num_examples


if __name__ == "__main__":
    key = jax.random.PRNGKey(0)
    k1, k2 = jax.random.split(key)

    N, C, H, W = 2, 4, 16, 16
    # labels in {-1, 0, ..., C}; -1 is the ignore index, 0 = background
    labels = jax.random.randint(k1, (N, H, W), minval=-1, maxval=C + 1,
                                dtype=jnp.int32)
    preds = jax.random.normal(k2, (N, C, H, W), dtype=jnp.float32)

    out = accuracy(labels, preds)
    out = jax.block_until_ready(out)

    ref = jax.block_until_ready(_reference(labels, preds))
    np.testing.assert_allclose(np.asarray(out), np.asarray(ref),
                               rtol=1e-6, atol=1e-6)

    print("KERNEL_OK")
</pallas_src>

<mosaic_0001>
module attributes {stable_mosaic.version = 11 : i64} {
  func.func @_accuracy_kernel(%arg0: i32, %arg1: i32, %arg2: i32, %arg3: memref<1x2x128xi32, #tpu.memory_space<vmem>>, %arg4: memref<1x4x2x128xf32, #tpu.memory_space<vmem>>, %arg5: memref<1x1x2x128xf32, #tpu.memory_space<vmem>>, %arg6: memref<1x1x2x128xf32, #tpu.memory_space<vmem>>) attributes {dimension_semantics = [#tpu.dimension_semantics<parallel>, #tpu.dimension_semantics<parallel>, #tpu.dimension_semantics<arbitrary>], iteration_bounds = array<i64: 1, 2, 1>, scalar_prefetch = 0 : i64, scratch_operands = 0 : i64, tpu.core_type = #tpu.core_type<tc>, window_params = [{transform_indices = @transform_0, window_bounds = array<i64: 1, 2, 128>}, {transform_indices = @transform_1, window_bounds = array<i64: 1, 4, 2, 128>}, {transform_indices = @transform_2, window_bounds = array<i64: 1, 1, 2, 128>}, {transform_indices = @transform_3, window_bounds = array<i64: 1, 1, 2, 128>}]} {
    %c0_i32 = arith.constant 0 : i32
    %0 = arith.cmpi eq, %arg2, %c0_i32 : i32
    %1 = arith.extui %0 : i1 to i32
    %c0_i32_0 = arith.constant 0 : i32
    %2 = arith.cmpi ne, %1, %c0_i32_0 : i32
    scf.if %2 {
      %cst_38 = arith.constant 0.000000e+00 : f32
      %66 = vector.broadcast %cst_38 : f32 to vector<1x1x2x128xf32>
      %c0_39 = arith.constant 0 : index
      %c0_40 = arith.constant 0 : index
      %c0_41 = arith.constant 0 : index
      %c0_42 = arith.constant 0 : index
      %67 = vector.load %arg5[%c0_39, %c0_40, %c0_41, %c0_42] : memref<1x1x2x128xf32, #tpu.memory_space<vmem>>, vector<1x1x2x128xf32>
      tpu.vector_store %arg5[%c0_39, %c0_40, %c0_41, %c0_42], %66 {strides = array<i32>} : memref<1x1x2x128xf32, #tpu.memory_space<vmem>>, vector<1x1x2x128xf32>,
      %cst_43 = arith.constant 0.000000e+00 : f32
      %68 = vector.broadcast %cst_43 : f32 to vector<1x1x2x128xf32>
      %c0_44 = arith.constant 0 : index
      %c0_45 = arith.constant 0 : index
      %c0_46 = arith.constant 0 : index
      %c0_47 = arith.constant 0 : index
      %69 = vector.load %arg6[%c0_44, %c0_45, %c0_46, %c0_47] : memref<1x1x2x128xf32, #tpu.memory_space<vmem>>, vector<1x1x2x128xf32>
      tpu.vector_store %arg6[%c0_44, %c0_45, %c0_46, %c0_47], %68 {strides = array<i32>} : memref<1x1x2x128xf32, #tpu.memory_space<vmem>>, vector<1x1x2x128xf32>,
    } else {
    }
    %c1_i32 = arith.constant 1 : i32
    %3 = arith.muli %arg0, %c1_i32 : i32
    %4 = arith.addi %3, %arg2 : i32
    %c2_i32 = arith.constant 2 : i32
    %5 = arith.muli %4, %c2_i32 : i32
    %c0 = arith.constant 0 : index
    %c0_1 = arith.constant 0 : index
    %c0_2 = arith.constant 0 : index
    %6 = vector.load %arg3[%c0, %c0_1, %c0_2] : memref<1x2x128xi32, #tpu.memory_space<vmem>>, vector<1x2x128xi32>
    %7 = vector.shape_cast %6 : vector<1x2x128xi32> to vector<2x128xi32>
    %c0_3 = arith.constant 0 : index
    %c0_4 = arith.constant 0 : index
    %c0_5 = arith.constant 0 : index
    %c0_6 = arith.constant 0 : index
    %8 = vector.load %arg4[%c0_3, %c0_4, %c0_5, %c0_6] : memref<1x4x2x128xf32, #tpu.memory_space<vmem>>, vector<1x1x2x128xf32>
    %9 = vector.shape_cast %8 : vector<1x1x2x128xf32> to vector<2x128xf32>
    %c0_i32_7 = arith.constant 0 : i32
    %10 = vector.broadcast %c0_i32_7 : i32 to vector<2x128xi32>
    %c0_8 = arith.constant 0 : index
    %c1 = arith.constant 1 : index
    %c0_9 = arith.constant 0 : index
    %c0_10 = arith.constant 0 : index
    %11 = vector.load %arg4[%c0_8, %c1, %c0_9, %c0_10] : memref<1x4x2x128xf32, #tpu.memory_space<vmem>>, vector<1x1x2x128xf32>
    %12 = vector.shape_cast %11 : vector<1x1x2x128xf32> to vector<2x128xf32>
    %13 = arith.cmpf ogt, %12, %9 : vector<2x128xf32>
    %14 = arith.select %13, %12, %9 : vector<2x128xi1>, vector<2x128xf32>
    %c1_i32_11 = arith.constant 1 : i32
    %15 = vector.broadcast %c1_i32_11 : i32 to vector<2x128xi32>
    %16 = arith.select %13, %15, %10 : vector<2x128xi1>, vector<2x128xi32>
    %c0_12 = arith.constant 0 : index
    %c2 = arith.constant 2 : index
    %c0_13 = arith.constant 0 : index
    %c0_14 = arith.constant 0 : index
    %17 = vector.load %arg4[%c0_12, %c2, %c0_13, %c0_14] : memref<1x4x2x128xf32, #tpu.memory_space<vmem>>, vector<1x1x2x128xf32>
    %18 = vector.shape_cast %17 : vector<1x1x2x128xf32> to vector<2x128xf32>
    %19 = arith.cmpf ogt, %18, %14 : vector<2x128xf32>
    %20 = arith.select %19, %18, %14 : vector<2x128xi1>, vector<2x128xf32>
    %c2_i32_15 = arith.constant 2 : i32
    %21 = vector.broadcast %c2_i32_15 : i32 to vector<2x128xi32>
    %22 = arith.select %19, %21, %16 : vector<2x128xi1>, vector<2x128xi32>
    %c0_16 = arith.constant 0 : index
    %c3 = arith.constant 3 : index
    %c0_17 = arith.constant 0 : index
    %c0_18 = arith.constant 0 : index
    %23 = vector.load %arg4[%c0_16, %c3, %c0_17, %c0_18] : memref<1x4x2x128xf32, #tpu.memory_space<vmem>>, vector<1x1x2x128xf32>
    %24 = vector.shape_cast %23 : vector<1x1x2x128xf32> to vector<2x128xf32>
    %25 = arith.cmpf ogt, %24, %20 : vector<2x128xf32>
    %26 = arith.select %25, %24, %20 : vector<2x128xi1>, vector<2x128xf32>
    %c3_i32 = arith.constant 3 : i32
    %27 = vector.broadcast %c3_i32 : i32 to vector<2x128xi32>
    %28 = arith.select %25, %27, %22 : vector<2x128xi1>, vector<2x128xi32>
    %cst = arith.constant 0.000000e+00 : f32
    %29 = vector.broadcast %cst : f32 to vector<2x128xf32>
    %30 = arith.cmpf ogt, %26, %29 : vector<2x128xf32>
    %c1_i32_19 = arith.constant 1 : i32
    %31 = vector.broadcast %c1_i32_19 : i32 to vector<2x128xi32>
    %32 = arith.addi %28, %31 : vector<2x128xi32>
    %c0_i32_20 = arith.constant 0 : i32
    %33 = vector.broadcast %c0_i32_20 : i32 to vector<2x128xi32>
    %34 = arith.select %30, %32, %33 : vector<2x128xi1>, vector<2x128xi32>
    %35 = tpu.iota {dimensions = array<i32: 0>} : vector<2x128xi32>
    %36 = tpu.iota {dimensions = array<i32: 1>} : vector<2x128xi32>
    %c0_i32_21 = arith.constant 0 : i32
    %37 = arith.addi %5, %c0_i32_21 : i32
    %38 = vector.broadcast %37 : i32 to vector<2x128xi32>
    %39 = arith.addi %38, %35 : vector<2x128xi32>
    %c128_i32 = arith.constant 128 : i32
    %40 = vector.broadcast %c128_i32 : i32 to vector<2x128xi32>
    %41 = arith.muli %39, %40 : vector<2x128xi32>
    %42 = arith.addi %41, %36 : vector<2x128xi32>
    %c256_i32 = arith.constant 256 : i32
    %43 = vector.broadcast %c256_i32 : i32 to vector<2x128xi32>
    %44 = arith.cmpi slt, %42, %43 : vector<2x128xi32>
    %45 = arith.cmpi eq, %34, %7 : vector<2x128xi32>
    %46 = arith.andi %45, %44 : vector<2x128xi1>
    %47 = arith.extui %46 : vector<2x128xi1> to vector<2x128xi32>
    %48 = arith.sitofp %47 : vector<2x128xi32> to vector<2x128xf32>
    %c-1_i32 = arith.constant -1 : i32
    %49 = vector.broadcast %c-1_i32 : i32 to vector<2x128xi32>
    %50 = arith.cmpi ne, %7, %49 : vector<2x128xi32>
    %51 = arith.andi %50, %44 : vector<2x128xi1>
    %52 = arith.extui %51 : vector<2x128xi1> to vector<2x128xi32>
    %53 = arith.sitofp %52 : vector<2x128xi32> to vector<2x128xf32>
    %c0_22 = arith.constant 0 : index
    %c0_23 = arith.constant 0 : index
    %c0_24 = arith.constant 0 : index
    %c0_25 = arith.constant 0 : index
    %54 = vector.load %arg5[%c0_22, %c0_23, %c0_24, %c0_25] : memref<1x1x2x128xf32, #tpu.memory_space<vmem>>, vector<1x1x2x128xf32>
    %55 = vector.shape_cast %54 : vector<1x1x2x128xf32> to vector<2x128xf32>
    %56 = arith.addf %55, %48 : vector<2x128xf32>
    %c0_26 = arith.constant 0 : index
    %c0_27 = arith.constant 0 : index
    %c0_28 = arith.constant 0 : index
    %c0_29 = arith.constant 0 : index
    %57 = vector.load %arg5[%c0_26, %c0_27, %c0_28, %c0_29] : memref<1x1x2x128xf32, #tpu.memory_space<vmem>>, vector<1x1x2x128xf32>
    %58 = vector.shape_cast %57 : vector<1x1x2x128xf32> to vector<2x128xf32>
    %59 = vector.shape_cast %56 : vector<2x128xf32> to vector<1x1x2x128xf32>
    tpu.vector_store %arg5[%c0_26, %c0_27, %c0_28, %c0_29], %59 {strides = array<i32>} : memref<1x1x2x128xf32, #tpu.memory_space<vmem>>, vector<1x1x2x128xf32>,
    %c0_30 = arith.constant 0 : index
    %c0_31 = arith.constant 0 : index
    %c0_32 = arith.constant 0 : index
    %c0_33 = arith.constant 0 : index
    %60 = vector.load %arg6[%c0_30, %c0_31, %c0_32, %c0_33] : memref<1x1x2x128xf32, #tpu.memory_space<vmem>>, vector<1x1x2x128xf32>
    %61 = vector.shape_cast %60 : vector<1x1x2x128xf32> to vector<2x128xf32>
    %62 = arith.addf %61, %53 : vector<2x128xf32>
    %c0_34 = arith.constant 0 : index
    %c0_35 = arith.constant 0 : index
    %c0_36 = arith.constant 0 : index
    %c0_37 = arith.constant 0 : index
    %63 = vector.load %arg6[%c0_34, %c0_35, %c0_36, %c0_37] : memref<1x1x2x128xf32, #tpu.memory_space<vmem>>, vector<1x1x2x128xf32>
    %64 = vector.shape_cast %63 : vector<1x1x2x128xf32> to vector<2x128xf32>
    %65 = vector.shape_cast %62 : vector<2x128xf32> to vector<1x1x2x128xf32>
    tpu.vector_store %arg6[%c0_34, %c0_35, %c0_36, %c0_37], %65 {strides = array<i32>} : memref<1x1x2x128xf32, #tpu.memory_space<vmem>>, vector<1x1x2x128xf32>,
    return
  }
  func.func @transform_0(%arg0: i32, %arg1: i32, %arg2: i32) -> (i32, i32, i32) {
    %c1_i32 = arith.constant 1 : i32
    %0 = arith.muli %arg0, %c1_i32 : i32
    %1 = arith.addi %0, %arg2 : i32
    %c0_i32 = arith.constant 0 : i32
    %c0_i32_0 = arith.constant 0 : i32
    return %arg1, %1, %c0_i32 : i32, i32, i32
  }
  func.func @transform_1(%arg0: i32, %arg1: i32, %arg2: i32) -> (i32, i32, i32, i32) {
    %c1_i32 = arith.constant 1 : i32
    %0 = arith.muli %arg0, %c1_i32 : i32
    %1 = arith.addi %0, %arg2 : i32
    %c0_i32 = arith.constant 0 : i32
    %c0_i32_0 = arith.constant 0 : i32
    %c0_i32_1 = arith.constant 0 : i32
    return %arg1, %c0_i32, %1, %c0_i32_0 : i32, i32, i32, i32
  }
  func.func @transform_2(%arg0: i32, %arg1: i32, %arg2: i32) -> (i32, i32, i32, i32) {
    %c0_i32 = arith.constant 0 : i32
    %c0_i32_0 = arith.constant 0 : i32
    %c0_i32_1 = arith.constant 0 : i32
    return %arg0, %arg1, %c0_i32, %c0_i32_0 : i32, i32, i32, i32
  }
  func.func @transform_3(%arg0: i32, %arg1: i32, %arg2: i32) -> (i32, i32, i32, i32) {
    %c0_i32 = arith.constant 0 : i32
    %c0_i32_0 = arith.constant 0 : i32
    %c0_i32_1 = arith.constant 0 : i32
    return %arg0, %arg1, %c0_i32, %c0_i32_0 : i32, i32, i32, i32
  }
}

</mosaic_0001>

<llo_original>
// kernel: tpu_custom_call.1
$region0: #{tpu_custom_call.1}
  #allocation0 [shape = 'u32[]', space=smem, size = 0x4, offset = 0x4, fixed_abs, tag = 'smem constant byte address 0x4 - core index']
  #allocation1 [shape = 'u32[72,128]{1,0:T(1,128)}', space=vmem, size = 0x9000, scoped, tag = 'internal scratch']
  %s0 = inlined_call_operand.hbm [shape: s32[2,2,128], index: 0, kind: input, shape index: {}]
  %s1 = inlined_call_operand.hbm [shape: f32[2,4,2,128], index: 1, kind: input, shape index: {}]
  %s2 = inlined_call_operand.hbm [shape: f32[1,2,2,128], index: 2, kind: output, shape index: {0}]
  %s3 = inlined_call_operand.hbm [shape: f32[1,2,2,128], index: 3, kind: output, shape index: {1}]
  %4 = xla_tuple %s2, %s3
  %s5 = sld [smem:[#allocation0]]
  $region61: #{tpu_custom_call.1} parent=0
    _
  %s7 = ssub.s32 1, %s5
  %s8 = scalar_select 0, %s7, %s5
  $region1: #{tpu_custom_call.1} parent=0
    #allocation2 [shape = 'u8[2048]{0}', space=vmem, size = 0x800, scoped, tag = 'input window, operand 0']
    #allocation3 [shape = 's32[2]{0}', space=sflag, size = 0x8, scoped, tag = 'scoped memory for tpu_custom_call.1']
    #allocation4 [shape = 's32[2]{0}', space=sflag, size = 0x8, scoped, tag = 'scoped memory for tpu_custom_call.1']
    #allocation5 [shape = 'u8[8192]{0}', space=vmem, size = 0x2000, scoped, tag = 'input window, operand 1']
    #allocation6 [shape = 's32[2]{0}', space=sflag, size = 0x8, scoped, tag = 'scoped memory for tpu_custom_call.1']
    #allocation7 [shape = 'u8[2048]{0}', space=vmem, size = 0x800, scoped, tag = 'output window, operand 0']
    #allocation8 [shape = 'u8[2048]{0}', space=vmem, size = 0x800, scoped, tag = 'output window, operand 1']
    #allocation9 [shape = 's32[2]{0}', space=sflag, size = 0x8, scoped, tag = 'scoped memory for tpu_custom_call.1']
    %9 = vsyncpa [#allocation3], 0
    %s10 = scalar_lea.sflag [#allocation3], 1
    %11 = vsyncpa %s10, 0
    %12 = vsyncpa [#allocation6], 0
    %s13 = scalar_lea.sflag [#allocation6], 1
    %14 = vsyncpa %s13, 0
    %15 = vsyncpa [#allocation4], 0
    %s16 = scalar_lea.sflag [#allocation4], 1
    %17 = vsyncpa %s16, 0
    %18 = vsyncpa [#allocation9], 0
    %s19 = scalar_lea.sflag [#allocation9], 1
    %20 = vsyncpa %s19, 0
    loop: start=0, step=1, limit=4
    $region2: #{tpu_custom_call.1} parent=1 // loop_pre_header
      _
    $region3: #{tpu_custom_call.1} parent=1 // loop_header
      %s22 = sphi 0, %s26
      %p23 = scmp.ge.s32.totalorder %s22, 4
      %s29 = sphi 0, %s48
      %s30 = sphi 0, %s44
      %s31 = sphi 0, %s40
      %s32 = sphi 0, %s29
      %s33 = sphi 0, %s30
      %s34 = sphi 0, %s31
      %s35 = sphi 0, %s32
      %s36 = sphi 0, %s33
      %s37 = sphi 0, %s34
      %s55 = sphi 0, %s57
      %s58 = sphi 0, %s55
      %s59 = sphi 0, %s58
      %s75 = sphi 0, %s59
      %s85 = sphi 0, %s87
      %s88 = sphi 0, %s85
      %s89 = sphi 0, %s88
      %s105 = sphi 0, %s89
      %s113 = sphi 0, %s115
      %s116 = sphi 0, %s113
      %s117 = sphi 0, %s116
      %s133 = sphi 0, %s117
      %s141 = sphi 0, %s143
      %s144 = sphi 0, %s141
      %s145 = sphi 0, %s144
      %s161 = sphi 0, %s145
    $region4: #{tpu_custom_call.1} parent=1 // loop_header_branch
      %25 = sbr.rel (%p23) target = $region8
    $region5: #{tpu_custom_call.1} parent=1 // loop_body
      %s27 = ssub.s32 %s22, 1
      %s28 = ssub.s32 %s22, 2
      %s38 = sadd.s32 1, %s31
      %p39 = scmp.ge.s32.totalorder %s38, 1
      %s40 = scalar_select %p39, 0, %s38
      %s41 = sadd.s32 1, %s30
      %s42 = scalar_select %p39, %s41, %s30
      %p43 = scmp.ge.s32.totalorder %s42, 2
      %s44 = scalar_select %p43, 0, %s42
      %s45 = sadd.s32 1, %s29
      %s46 = scalar_select %p43, %s45, %s29
      %p47 = scmp.ge.s32.totalorder %s46, 1
      %s48 = scalar_select %p47, 0, %s46
      %s49 = sadd.s32 %s29, %s31
      %s50 = sadd.s32 %s48, %s40
      %s51 = ssub.s32 %s30, %s44
      %s52 = ssub.s32 %s49, %s50
      %s53 = sor.u32 %s51, %s52
      %p54 = scmp.eq.s32.totalorder %s53, 0
      %s56 = sadd.s32 %s55, 1
      %s57 = scalar_select %p54, %s55, %s56
      %p60 = pneg %p54
      %p61 = scmp.eq.s32.totalorder %s22, 1
      %p62 = por %p60, %p61
      %p63 = scmp.ne.s32.totalorder %s55, %s58
      %p64 = scmp.eq.s32.totalorder %s22, 0
      %p65 = por %p63, %p64
      %p66 = scmp.ne.s32.totalorder %s55, %s58
      %p67 = scmp.eq.s32.totalorder %s27, 1
      %p68 = por %p66, %p67
      %p69 = scmp.ne.s32.totalorder %s58, %s59
      %p70 = scmp.eq.s32.totalorder %s27, 0
      %p71 = por %p69, %p70
      %p72 = scmp.ne.s32.totalorder %s58, %s59
      %p73 = scmp.eq.s32.totalorder %s28, 1
      %p74 = por %p72, %p73
      %p76 = scmp.ne.s32.totalorder %s59, %s75
      %p77 = scmp.eq.s32.totalorder %s28, 0
      %p78 = por %p76, %p77
      %s79 = sadd.s32 %s29, %s31
      %s80 = sadd.s32 %s48, %s40
      %s81 = ssub.s32 %s30, %s44
      %s82 = ssub.s32 %s79, %s80
      %s83 = sor.u32 %s81, %s82
      %p84 = scmp.eq.s32.totalorder %s83, 0
      %s86 = sadd.s32 %s85, 1
      %s87 = scalar_select %p84, %s85, %s86
      %p90 = pneg %p84
      %p91 = scmp.eq.s32.totalorder %s22, 1
      %p92 = por %p90, %p91
      %p93 = scmp.ne.s32.totalorder %s85, %s88
      %p94 = scmp.eq.s32.totalorder %s22, 0
      %p95 = por %p93, %p94
      %p96 = scmp.ne.s32.totalorder %s85, %s88
      %p97 = scmp.eq.s32.totalorder %s27, 1
      %p98 = por %p96, %p97
      %p99 = scmp.ne.s32.totalorder %s88, %s89
      %p100 = scmp.eq.s32.totalorder %s27, 0
      %p101 = por %p99, %p100
      %p102 = scmp.ne.s32.totalorder %s88, %s89
      %p103 = scmp.eq.s32.totalorder %s28, 1
      %p104 = por %p102, %p103
      %p106 = scmp.ne.s32.totalorder %s89, %s105
      %p107 = scmp.eq.s32.totalorder %s28, 0
      %p108 = por %p106, %p107
      %s109 = ssub.s32 %s29, %s48
      %s110 = ssub.s32 %s30, %s44
      %s111 = sor.u32 %s109, %s110
      %p112 = scmp.eq.s32.totalorder %s111, 0
      %s114 = sadd.s32 %s113, 1
      %s115 = scalar_select %p112, %s113, %s114
      %p118 = pneg %p112
      %p119 = scmp.eq.s32.totalorder %s22, 1
      %p120 = por %p118, %p119
      %p121 = scmp.ne.s32.totalorder %s113, %s116
      %p122 = scmp.eq.s32.totalorder %s22, 0
      %p123 = por %p121, %p122
      %p124 = scmp.ne.s32.totalorder %s113, %s116
      %p125 = scmp.eq.s32.totalorder %s27, 1
      %p126 = por %p124, %p125
      %p127 = scmp.ne.s32.totalorder %s116, %s117
      %p128 = scmp.eq.s32.totalorder %s27, 0
      %p129 = por %p127, %p128
      %p130 = scmp.ne.s32.totalorder %s116, %s117
      %p131 = scmp.eq.s32.totalorder %s28, 1
      %p132 = por %p130, %p131
      %p134 = scmp.ne.s32.totalorder %s117, %s133
      %p135 = scmp.eq.s32.totalorder %s28, 0
      %p136 = por %p134, %p135
      %s137 = ssub.s32 %s29, %s48
      %s138 = ssub.s32 %s30, %s44
      %s139 = sor.u32 %s137, %s138
      %p140 = scmp.eq.s32.totalorder %s139, 0
      %s142 = sadd.s32 %s141, 1
      %s143 = scalar_select %p140, %s141, %s142
      %p146 = pneg %p140
      %p147 = scmp.eq.s32.totalorder %s22, 1
      %p148 = por %p146, %p147
      %p149 = scmp.ne.s32.totalorder %s141, %s144
      %p150 = scmp.eq.s32.totalorder %s22, 0
      %p151 = por %p149, %p150
      %p152 = scmp.ne.s32.totalorder %s141, %s144
      %p153 = scmp.eq.s32.totalorder %s27, 1
      %p154 = por %p152, %p153
      %p155 = scmp.ne.s32.totalorder %s144, %s145
      %p156 = scmp.eq.s32.totalorder %s27, 0
      %p157 = por %p155, %p156
      %p158 = scmp.ne.s32.totalorder %s144, %s145
      %p159 = scmp.eq.s32.totalorder %s28, 1
      %p160 = por %p158, %p159
      %p162 = scmp.ne.s32.totalorder %s145, %s161
      %p163 = scmp.eq.s32.totalorder %s28, 0
      %p164 = por %p162, %p163
      %p165 = scmp.le.s32.totalorder 1, %s22
      %p166 = scmp.lt.s32.totalorder %s22, 3
      %p167 = pnand %p165, %p166
      %p168 = pneg %p167
      // Predicated region
      $region9: #{tpu_custom_call.1} parent=5 // pred_check
        _
      $region10: #{tpu_custom_call.1} parent=5 // pred_check_branch
        %170 = sbr.rel (%p167) target = $region12
      $region11: #{tpu_custom_call.1} parent=5 // pred_region
        %s171 = ssub.s32 %s22, 1
      $region12: #{tpu_custom_call.1} parent=5 // pred_fallthru
        _
      %p172 = scmp.lt.s32.totalorder %s22, 2
      // Predicated region
      $region13: #{tpu_custom_call.1} parent=5 // pred_check
        %p173 = pneg %p172
      $region14: #{tpu_custom_call.1} parent=5 // pred_check_branch
        %175 = sbr.rel (%p173) target = $region16
      $region15: #{tpu_custom_call.1} parent=5 // pred_region
        // Predicated region
        $region17: #{tpu_custom_call.1} parent=15 // pred_check
          %p176 = pneg %p65
        $region18: #{tpu_custom_call.1} parent=15 // pred_check_branch
          %178 = sbr.rel (%p176) target = $region20
        $region19: #{tpu_custom_call.1} parent=15 // pred_region
          %s179 = sand.u32 %s55, 1
          %s180 = scalar_lea.sflag [#allocation3], %s179
          %s181 = sand.u32 %s55, 1
          %s182 = smul.addr %s181, 2
          %s183 = scalar_lea.vmem [#allocation2], %s182
          %s184 = sadd.s32 %s29, %s31
          %186 = vsyncadd %s180, 0
          %s187 = sadd.s32 %s184, %s30
          %s188 = smul.addr %s187, 2
          %s189 = scalar_lea.hbm %s0, %s188
          %s191 = sshll.u32 %s189, 4
          %s192 = int_to_ptr.hbm [resolvable:$true] %s191
          %s193 = sshll.u32 %s183, 4
          %s194 = int_to_ptr.vmem [resolvable:$true] %s193
          %196 = dma.hbm_to_vmem [thread:$0]  %s192, 32, %s194, %s180
        $region20: #{tpu_custom_call.1} parent=15 // pred_fallthru
          _
        // Predicated region
        $region21: #{tpu_custom_call.1} parent=15 // pred_check
          %p197 = pneg %p95
        $region22: #{tpu_custom_call.1} parent=15 // pred_check_branch
          %199 = sbr.rel (%p197) target = $region24
        $region23: #{tpu_custom_call.1} parent=15 // pred_region
          %s200 = sand.u32 %s85, 1
          %s201 = scalar_lea.sflag [#allocation6], %s200
          %s202 = sand.u32 %s85, 1
          %s203 = smul.addr %s202, 8
          %s204 = scalar_lea.vmem [#allocation5], %s203
          %s205 = sadd.s32 %s29, %s31
          %207 = vsyncadd %s201, 0
          %s208 = smul.addr %s30, 4
          %s209 = sadd.s32 %s205, %s208
          %s210 = smul.addr %s209, 2
          %s211 = scalar_lea.hbm %s1, %s210
          %s212 = sshll.u32 %s211, 4
          %s213 = int_to_ptr.hbm [resolvable:$true] %s212
          %s214 = sshll.u32 %s204, 4
          %s215 = int_to_ptr.vmem [resolvable:$true] %s214
          %220 = dma.hbm_to_vmem [thread:$0]  %s213, 128, %s215, %s201, 32, 32, 2
        $region24: #{tpu_custom_call.1} parent=15 // pred_fallthru
          _
      $region16: #{tpu_custom_call.1} parent=5 // pred_fallthru
        _
      %p221 = scmp.le.s32.totalorder 1, %s22
      %p222 = scmp.lt.s32.totalorder %s22, 3
      %p223 = pnand %p221, %p222
      %p224 = pneg %p223
      // Predicated region
      $region25: #{tpu_custom_call.1} parent=5 // pred_check
        _
      $region26: #{tpu_custom_call.1} parent=5 // pred_check_branch
        %226 = sbr.rel (%p223) target = $region28
      $region27: #{tpu_custom_call.1} parent=5 // pred_region
        %s227 = ssub.s32 %s22, 1
        %s228 = sand.u32 %s58, 1
        %s229 = scalar_lea.sflag [#allocation3], %s228
        %s230 = sand.u32 %s58, 1
        %s231 = smul.addr %s230, 2
        %s232 = scalar_lea.vmem [#allocation2], %s231
        // Predicated region
        $region29: #{tpu_custom_call.1} parent=27 // pred_check
          %p233 = pneg %p71
        $region30: #{tpu_custom_call.1} parent=27 // pred_check_branch
          %235 = sbr.rel (%p233) target = $region32
        $region31: #{tpu_custom_call.1} parent=27 // pred_region
          %237 = dma.done %s229, 32
        $region32: #{tpu_custom_call.1} parent=27 // pred_fallthru
          _
        %s238 = sand.u32 %s88, 1
        %s239 = scalar_lea.sflag [#allocation6], %s238
        %s240 = sand.u32 %s88, 1
        %s241 = smul.addr %s240, 8
        %s242 = scalar_lea.vmem [#allocation5], %s241
        // Predicated region
        $region33: #{tpu_custom_call.1} parent=27 // pred_check
          %p243 = pneg %p101
        $region34: #{tpu_custom_call.1} parent=27 // pred_check_branch
          %245 = sbr.rel (%p243) target = $region36
        $region35: #{tpu_custom_call.1} parent=27 // pred_region
          %247 = dma.done %s239, 128
        $region36: #{tpu_custom_call.1} parent=27 // pred_fallthru
          _
        %s248 = sand.u32 %s58, 1
        %s249 = scalar_lea.sflag [#allocation3], %s248
        %s250 = sand.u32 %s58, 1
        %s251 = smul.addr %s250, 2
        %s252 = scalar_lea.vmem [#allocation2], %s251
        %p253 = pneg %p71
        %p254 = pneg %p68
        %s255 = sand.u32 %s88, 1
        %s256 = scalar_lea.sflag [#allocation6], %s255
        %s257 = sand.u32 %s88, 1
        %s258 = smul.addr %s257, 8
        %s259 = scalar_lea.vmem [#allocation5], %s258
        %p260 = pneg %p101
        %p261 = pneg %p98
        %p262 = pneg %p129
        %p263 = pneg %p126
        %s264 = sand.u32 %s116, 1
        %s265 = scalar_lea.sflag [#allocation4], %s264
        %s266 = sand.u32 %s116, 1
        %s267 = smul.addr %s266, 2
        %s268 = scalar_lea.vmem [#allocation7], %s267
        %p269 = pneg %p157
        %p270 = pneg %p154
        %s271 = sand.u32 %s144, 1
        %s272 = scalar_lea.sflag [#allocation9], %s271
        %s273 = sand.u32 %s144, 1
        %s274 = smul.addr %s273, 2
        %s275 = scalar_lea.vmem [#allocation8], %s274
        %s276 = sadd.s32 %s32, %s34
        %s277 = sadd.s32 %s32, %s34
        %p278 = scmp.eq.s32.totalorder %s34, 0
        // Predicated region
        $region37: #{tpu_custom_call.1} parent=27 // pred_check
          %p279 = pneg %p278
        $region38: #{tpu_custom_call.1} parent=27 // pred_check_branch
          %281 = sbr.rel (%p279) target = $region40
        $region39: #{tpu_custom_call.1} parent=27 // pred_region
          %282 = vst [vmem:[%s268] sm:$0x3] 0.0
          %283 = vst [vmem:[%s275] sm:$0x3] 0.0
        $region40: #{tpu_custom_call.1} parent=27 // pred_fallthru
          _
        %s284 = sadd.s32 %s32, %s34
        %s285 = smul.u32 %s284, 2
        %v286 = vld [vmem:[%s232] sm:$0x3]
        %v287 = vld [vmem:[%s242] sm:$0x3]
        %s288 = scalar_lea.vmem %s242, 2 [#allocation5]
        %v289 = vld [vmem:[%s288] sm:$0x3]
        %vm290 = vcmp.gt.f32.partialorder %v289, %v287
        %v291 = vsel %vm290, %v289, %v287
        %v292 = vsel %vm290, 1, 0
        %s293 = scalar_lea.vmem %s242, 4 [#allocation5]
        %v294 = vld [vmem:[%s293] sm:$0x3]
        %vm295 = vcmp.gt.f32.partialorder %v294, %v291
        %v296 = vsel %vm295, %v294, %v291
        %v297 = vsel %vm295, 2, %v292
        %s298 = scalar_lea.vmem %s242, 6 [#allocation5]
        %v299 = vld [vmem:[%s298] sm:$0x3]
        %vm300 = vcmp.gt.f32.partialorder %v299, %v296
        %v301 = vsel %vm300, %v299, %v296
        %v302 = vsel %vm300, 3, %v297
        %vm303 = vcmp.gt.f32.partialorder %v301, 0.0
        %v304 = vadd.s32 %v302, 1
        %v305 = vsel %vm303, %v304, 0
        %v306 = vlaneseq
        %v307 = vshrl.u32 %v306, 7
        %v308 = vlaneseq
        %v309 = vand.u32 %v308, 127
        %v310 = vstv %s285
        %v311 = vadd.s32 %v310, %v307
        %v312 = vmul.u32 %v311, 128
        %v313 = vadd.s32 %v312, %v309
        %vm314 = vcmp.lt.s32.totalorder %v313, 256
        %vm315 = vcmp.eq.s32.totalorder %v305, %v286
        %vm316 = vmand %vm315, %vm314
        %v317 = vsel %vm316, 1, 0
        %v318 = vcvt.s32.f32 %v317
        %vm319 = vcmp.ne.s32.totalorder %v286, 4294967295
        %vm320 = vmand %vm319, %vm314
        %v321 = vsel %vm320, 1, 0
        %v322 = vcvt.s32.f32 %v321
        %v323 = vld [vmem:[%s268] sm:$0x3]
        %v324 = vadd.f32 %v323, %v318
        %325 = vst [vmem:[%s268] sm:$0x3] %v324
        %v326 = vld [vmem:[%s275] sm:$0x3]
        %v327 = vadd.f32 %v326, %v322
        %328 = vst [vmem:[%s275] sm:$0x3] %v327
        %s329 = sand.u32 %s116, 1
        %s330 = scalar_lea.sflag [#allocation4], %s329
        %s331 = sand.u32 %s116, 1
        %s332 = smul.addr %s331, 2
        %s333 = scalar_lea.vmem [#allocation7], %s332
        %s334 = sand.u32 %s144, 1
        %s335 = scalar_lea.sflag [#allocation9], %s334
        %s336 = sand.u32 %s144, 1
        %s337 = smul.addr %s336, 2
        %s338 = scalar_lea.vmem [#allocation8], %s337
        // Predicated region
        $region41: #{tpu_custom_call.1} parent=27 // pred_check
          %p339 = pneg %p126
        $region42: #{tpu_custom_call.1} parent=27 // pred_check_branch
          %341 = sbr.rel (%p339) target = $region44
        $region43: #{tpu_custom_call.1} parent=27 // pred_region
          %343 = vsyncadd %s330, 0
          %s344 = smul.addr %s32, 2
          %s345 = sadd.s32 %s33, %s344
          %s346 = smul.addr %s345, 2
          %s347 = scalar_lea.hbm %s2, %s346
          %s349 = sshll.u32 %s333, 4
          %s350 = int_to_ptr.vmem [resolvable:$true] %s349
          %s351 = sshll.u32 %s347, 4
          %s352 = int_to_ptr.hbm [resolvable:$true] %s351
          %354 = dma.vmem_to_hbm [thread:$0]  %s350, 32, %s352, %s330
        $region44: #{tpu_custom_call.1} parent=27 // pred_fallthru
          _
        // Predicated region
        $region45: #{tpu_custom_call.1} parent=27 // pred_check
          %p355 = pneg %p154
        $region46: #{tpu_custom_call.1} parent=27 // pred_check_branch
          %357 = sbr.rel (%p355) target = $region48
        $region47: #{tpu_custom_call.1} parent=27 // pred_region
          %359 = vsyncadd %s335, 0
          %s360 = smul.addr %s32, 2
          %s361 = sadd.s32 %s33, %s360
          %s362 = smul.addr %s361, 2
          %s363 = scalar_lea.hbm %s3, %s362
          %s365 = sshll.u32 %s338, 4
          %s366 = int_to_ptr.vmem [resolvable:$true] %s365
          %s367 = sshll.u32 %s363, 4
          %s368 = int_to_ptr.hbm [resolvable:$true] %s367
          %370 = dma.vmem_to_hbm [thread:$0]  %s366, 32, %s368, %s335
        $region48: #{tpu_custom_call.1} parent=27 // pred_fallthru
          _
      $region28: #{tpu_custom_call.1} parent=5 // pred_fallthru
        _
      %p371 = scmp.le.s32.totalorder 2, %s22
      // Predicated region
      $region49: #{tpu_custom_call.1} parent=5 // pred_check
        %p372 = pneg %p371
      $region50: #{tpu_custom_call.1} parent=5 // pred_check_branch
        %374 = sbr.rel (%p372) target = $region52
      $region51: #{tpu_custom_call.1} parent=5 // pred_region
        %s375 = ssub.s32 %s22, 2
        // Predicated region
        $region53: #{tpu_custom_call.1} parent=51 // pred_check
          %p376 = pneg %p132
        $region54: #{tpu_custom_call.1} parent=51 // pred_check_branch
          %378 = sbr.rel (%p376) target = $region56
        $region55: #{tpu_custom_call.1} parent=51 // pred_region
          %s379 = sand.u32 %s117, 1
          %s380 = scalar_lea.sflag [#allocation4], %s379
          %s381 = sand.u32 %s117, 1
          %s382 = smul.addr %s381, 2
          %s383 = scalar_lea.vmem [#allocation7], %s382
          %385 = dma.done %s380, 32
        $region56: #{tpu_custom_call.1} parent=51 // pred_fallthru
          _
        // Predicated region
        $region57: #{tpu_custom_call.1} parent=51 // pred_check
          %p386 = pneg %p160
        $region58: #{tpu_custom_call.1} parent=51 // pred_check_branch
          %388 = sbr.rel (%p386) target = $region60
        $region59: #{tpu_custom_call.1} parent=51 // pred_region
          %s389 = sand.u32 %s145, 1
          %s390 = scalar_lea.sflag [#allocation9], %s389
          %s391 = sand.u32 %s145, 1
          %s392 = smul.addr %s391, 2
          %s393 = scalar_lea.vmem [#allocation8], %s392
          %395 = dma.done %s390, 32
        $region60: #{tpu_custom_call.1} parent=51 // pred_fallthru
          _
      $region52: #{tpu_custom_call.1} parent=5 // pred_fallthru
        _
    $region6: #{tpu_custom_call.1} parent=1 // loop_footer
      %s26 = sadd.s32 1, %s22
    $region7: #{tpu_custom_call.1} parent=1 // loop_footer_branch
      %21 = sbr.rel target = $region3
    $region8: #{tpu_custom_call.1} parent=1 // loop_exit
      _
    %396 = vsyncpa [#allocation3], 1
    %s397 = scalar_lea.sflag [#allocation3], 1
    %398 = vsyncpa %s397, 1
    %399 = vsyncpa [#allocation6], 1
    %s400 = scalar_lea.sflag [#allocation6], 1
    %401 = vsyncpa %s400, 1
    %402 = vsyncpa [#allocation4], 1
    %s403 = scalar_lea.sflag [#allocation4], 1
    %404 = vsyncpa %s403, 1
    %405 = vsyncpa [#allocation9], 1
    %s406 = scalar_lea.sflag [#allocation9], 1
    %407 = vsyncpa %s406, 1

</llo_original>
